<compile_context>
chip_gen: v6e
topology: v6e:2x2x1
jax: 0.10.0
libtpu: 0.0.40
codegen_flags: <defaults>
</compile_context>

<pallas_src>
import functools

import jax
import jax.numpy as jnp
from jax import lax
from jax.experimental import pallas as pl
from jax.experimental.pallas import tpu as pltpu


def _round_up(x, m):
    return ((x + m - 1) // m) * m


def _largest_divisor_leq(n, cap):
    cap = max(1, min(n, cap))
    for d in range(cap, 0, -1):
        if n % d == 0:
            return d
    return 1


def _distribution_kernel(*refs, has_force, mxu_dtype):
    """One grid step == (Bb batches) x (Tq query rows).

    refs (in order):
      q_ref  : VMEM (Bb, Tq, DQ)
      k_ref  : VMEM (Bb, TK, DK)
      wq_ref : VMEM (DQ, DI)  (mxu_dtype)
      wk_ref : VMEM (DK, DI)  (mxu_dtype)
      f_ref  : VMEM (Bb, 1, 1) float32 0/1      (only if has_force)
      o_ref  : VMEM (Bb, Tq, TK)
      kp_ref : VMEM scratch (Bb, TK, DI) mxu_dtype -- cached key projection
    """
    if has_force:
        q_ref, k_ref, wq_ref, wk_ref, f_ref, o_ref, kp_ref = refs
    else:
        q_ref, k_ref, wq_ref, wk_ref, o_ref, kp_ref = refs
        f_ref = None

    bb, tq, dq = q_ref.shape
    _, tk, dk = k_ref.shape
    di = wq_ref.shape[1]

    # K projection: computed once per batch block, cached in VMEM scratch.
    # The TQ axis is the inner "arbitrary" grid axis, so the cache is reused
    # by every TQ tile of this batch block.
    @pl.when(pl.program_id(1) == 0)
    def _():
        k2 = k_ref[...].reshape(bb * tk, dk).astype(mxu_dtype)
        kp = jnp.dot(k2, wk_ref[...], preferred_element_type=jnp.float32)
        kp_ref[...] = kp.reshape(bb, tk, di).astype(kp_ref.dtype)

    # Q projection: one large-M MXU matmul (bf16 operands, f32 accumulate).
    q2 = q_ref[...].reshape(bb * tq, dq).astype(mxu_dtype)
    q = jnp.dot(q2, wq_ref[...], preferred_element_type=jnp.float32)
    q = q.reshape(bb, tq, di).astype(mxu_dtype)

    # Logits: 'b q d, b k d -> b q k' (contract last dims, no XLU transpose).
    s = lax.dot_general(
        q, kp_ref[...], (((2,), (2,)), ((0,), (0,))),
        preferred_element_type=jnp.float32,
    )  # (bb, tq, tk), f32

    # Numerically stable softmax over the key axis. Exact divide so each row
    # sums to 1 (output is consumed as a probability distribution).
    m = jnp.max(s, axis=-1, keepdims=True)
    e = jnp.exp(s - m)
    w = e / jnp.sum(e, axis=-1, keepdims=True)

    if has_force:
        # Single small iota; jnp.where matches torch semantics exactly
        # (no NaN leakage into forced rows).
        col = lax.broadcasted_iota(jnp.int32, (1, 1, tk), 2)
        onehot = (col == (tk - 1)).astype(w.dtype)
        w = jnp.where(f_ref[...] > 0.0, onehot, w)

    o_ref[...] = w.astype(o_ref.dtype)


def distribution_forward(queries, keys, wq, wk, force_last_token=None, *,
                         mxu_dtype=jnp.bfloat16, out_dtype=None):
    """Pallas wrapper.

    queries : (B, TQ, DQ)
    keys    : (B, TK, DK)
    wq      : (DI, DQ)  -- PyTorch nn.Linear weight layout (to_q.weight)
    wk      : (DI, DK)  -- to_k.weight
    force_last_token : optional bool (B,)
    mxu_dtype : MXU operand dtype (bf16 default; jnp.float32 for full precision)
    out_dtype : output dtype (defaults to queries.dtype; bf16 halves the
                dominant HBM output stream if downstream tolerates it)
    returns : (B, TQ, TK)
    """
    B, TQ, DQ = queries.shape
    _, TK, DK = keys.shape
    DI = wq.shape[0]
    out_dtype = queries.dtype if out_dtype is None else out_dtype
    has_force = force_last_token is not None

    # Pre-transpose / pre-cast Linear weights (tiny one-time glue): y = x @ W^T.
    wq_t = wq.T.astype(mxu_dtype)   # (DQ, DI)
    wk_t = wk.T.astype(mxu_dtype)   # (DK, DI)

    # --- Generation-aware VMEM budgeting -------------------------------------
    try:
        info = pltpu.get_tpu_info()
        vmem_cap = int(getattr(info, "vmem_capacity_bytes", 0)) or (64 << 20)
    except Exception:
        vmem_cap = 64 << 20          # conservative (v7x-sized) fallback
    block_budget = vmem_cap // 2     # target for the full per-step working set
    vmem_limit = int(vmem_cap * 0.85)

    mxu_bytes = jnp.dtype(mxu_dtype).itemsize
    f32b = 4

    def _lane(n):                    # lane (last-dim) padding
        return _round_up(n, 128)

    def _sub(n):                     # sublane padding
        return _round_up(n, 8)

    def est_bytes(bb, tq):
        # Double-buffered input / output blocks.
        q_blk = bb * _sub(tq) * _lane(DQ) * f32b * 2
        k_blk = bb * _sub(TK) * _lane(DK) * f32b * 2
        o_blk = bb * _sub(tq) * _lane(TK) * f32b * 2
        w_blk = (_sub(DQ) + _sub(DK)) * _lane(DI) * mxu_bytes * 2
        f_blk = bb * 8 * 128 * f32b * 2 if has_force else 0
        # Persistent K-projection cache (single-buffered scratch).
        k_cache = bb * _sub(TK) * _lane(DI) * mxu_bytes
        # In-kernel f32 intermediates: logits / exp / weights + q,k projections.
        tmp = bb * _sub(tq) * _lane(TK) * f32b * 3
        tmp += bb * _sub(tq) * _lane(DI) * (f32b + mxu_bytes)
        tmp += bb * _sub(TK) * _lane(DI) * f32b
        return q_blk + k_blk + o_blk + w_blk + f_blk + k_cache + tmp

    def _next_divisor_below(n, cur):
        for d in range(cur - 1, 0, -1):
            if n % d == 0:
                return d
        return 1

    # Prefer full TQ per step (biggest blocks); shrink batch block first, then
    # tile TQ in multiples of 8 (pl.cdiv grid handles any remainder block).
    Bb, Tq = B, TQ
    while est_bytes(Bb, Tq) > block_budget and Bb > 1:
        Bb = _next_divisor_below(B, Bb)
    if est_bytes(Bb, Tq) > block_budget and TQ > 8:
        Tq = max(8, (TQ // 2) // 8 * 8)
        while est_bytes(Bb, Tq) > block_budget and Tq > 8:
            Tq = max(8, (Tq // 2) // 8 * 8)

    # Megacore (v7x has 2 TensorCores): guarantee >= 2 steps along the
    # "parallel" batch axis whenever B allows (one extra step elsewhere).
    if B >= 2 and B // Bb == 1:
        Bb = _largest_divisor_leq(B, B // 2)
    # TODO(synk): for B == 1 with many TQ tiles the second v7x core idles; the
    # TQ axis stays "arbitrary" so the cached K projection can be reused.

    grid = (B // Bb, pl.cdiv(TQ, Tq))

    kernel = functools.partial(
        _distribution_kernel, has_force=has_force, mxu_dtype=mxu_dtype
    )

    in_specs = [
        pl.BlockSpec((Bb, Tq, DQ), lambda b, i: (b, i, 0)),
        pl.BlockSpec((Bb, TK, DK), lambda b, i: (b, 0, 0)),
        pl.BlockSpec((DQ, DI), lambda b, i: (0, 0)),
        pl.BlockSpec((DK, DI), lambda b, i: (0, 0)),
    ]
    args = [queries, keys, wq_t, wk_t]
    if has_force:
        force_f = force_last_token.astype(jnp.float32).reshape(B, 1, 1)
        in_specs.append(pl.BlockSpec((Bb, 1, 1), lambda b, i: (b, 0, 0)))
        args.append(force_f)

    # Unpadded (B, TQ, TK) output: no key-axis padding, no post-kernel slice.
    return pl.pallas_call(
        kernel,
        out_shape=jax.ShapeDtypeStruct((B, TQ, TK), out_dtype),
        grid=grid,
        in_specs=in_specs,
        out_specs=pl.BlockSpec((Bb, Tq, TK), lambda b, i: (b, i, 0)),
        scratch_shapes=[pltpu.VMEM((Bb, TK, DI), mxu_dtype)],
        compiler_params=pltpu.CompilerParams(
            dimension_semantics=("parallel", "arbitrary"),
            vmem_limit_bytes=vmem_limit,
        ),
    )(*args)


def distribution_reference(queries, keys, wq, wk, force_last_token=None,
                           mxu_dtype=None):
    """Pure-JAX reference mirroring the PyTorch forward.

    If mxu_dtype is given, matmul operands are cast to it (f32 accumulation,
    f32 softmax) so the reference is precision-matched to the kernel's MXU path.
    """
    wq_t, wk_t = wq.T, wk.T
    qin, kin = queries, keys
    if mxu_dtype is not None:
        qin, kin = qin.astype(mxu_dtype), kin.astype(mxu_dtype)
        wq_t, wk_t = wq_t.astype(mxu_dtype), wk_t.astype(mxu_dtype)
    q = jnp.dot(qin, wq_t, preferred_element_type=jnp.float32)
    k = jnp.dot(kin, wk_t, preferred_element_type=jnp.float32)
    if mxu_dtype is not None:
        q, k = q.astype(mxu_dtype), k.astype(mxu_dtype)
    s = jnp.einsum("bqd,bkd->bqk", q, k, preferred_element_type=jnp.float32)
    w = jax.nn.softmax(s, axis=-1)
    if force_last_token is None:
        return w
    tk = keys.shape[1]
    last_token = jnp.zeros((tk,), dtype=w.dtype).at[-1].set(1.0)
    mask = force_last_token[:, None, None]
    return jnp.where(mask, last_token[None, None, :], w)


if __name__ == "__main__":
    # Small shapes consistent with the module (dim_inner default = 64).
    B, TQ, TK = 2, 8, 16
    DQ, DK, DI = 32, 16, 64

    key = jax.random.PRNGKey(0)
    kq, kk, kwq, kwk = jax.random.split(key, 4)

    queries = jax.random.normal(kq, (B, TQ, DQ), dtype=jnp.float32)
    keys = jax.random.normal(kk, (B, TK, DK), dtype=jnp.float32)

    # nn.Linear weight shapes: (dim_inner, dim_in).
    wq = jax.random.normal(kwq, (DI, DQ), dtype=jnp.float32) * (DQ ** -0.5)
    wk = jax.random.normal(kwk, (DI, DK), dtype=jnp.float32) * (DK ** -0.5)

    force_last_token = jnp.array([True, False])

    # Case 1: no forcing.
    out_none = distribution_forward(queries, keys, wq, wk, None)
    jax.block_until_ready(out_none)

    # Case 2: with force_last_token.
    out_force = distribution_forward(queries, keys, wq, wk, force_last_token)
    jax.block_until_ready(out_force)

    # Precision-matched references (bf16 MXU operands / f32 softmax) so the
    # check isolates kernel correctness from the deliberate bf16-MXU choice.
    ref_none = distribution_reference(queries, keys, wq, wk, None,
                                      mxu_dtype=jnp.bfloat16)
    ref_force = distribution_reference(queries, keys, wq, wk, force_last_token,
                                       mxu_dtype=jnp.bfloat16)

    assert out_none.shape == (B, TQ, TK) and out_force.shape == (B, TQ, TK)
    assert jnp.allclose(out_none, ref_none, atol=5e-3, rtol=5e-3)
    assert jnp.allclose(out_force, ref_force, atol=5e-3, rtol=5e-3)
    # Rows are proper probability distributions (exact softmax divide).
    assert jnp.allclose(out_none.sum(-1), 1.0, atol=1e-3)
    # Forced batch (index 0): exact one-hot on the last key token.
    assert jnp.allclose(out_force[0, :, -1], 1.0)
    assert jnp.allclose(out_force[0, :, :-1], 0.0)
    # Non-forced batch matches the unforced output.
    assert jnp.allclose(out_force[1], out_none[1], atol=1e-4)

    print("KERNEL_OK")
</pallas_src>

<mosaic_0001>
module attributes {stable_mosaic.version = 11 : i64} {
  func.func @_distribution_kernel(%arg0: i32, %arg1: i32, %arg2: memref<1x8x32xf32, #tpu.memory_space<vmem>>, %arg3: memref<1x16x16xf32, #tpu.memory_space<vmem>>, %arg4: memref<32x64xbf16, #tpu.memory_space<vmem>>, %arg5: memref<16x64xbf16, #tpu.memory_space<vmem>>, %arg6: memref<1x8x16xf32, #tpu.memory_space<vmem>>, %arg7: memref<1x16x64xbf16, #tpu.memory_space<vmem>>) attributes {dimension_semantics = [#tpu.dimension_semantics<parallel>, #tpu.dimension_semantics<arbitrary>], iteration_bounds = array<i64: 2, 1>, scalar_prefetch = 0 : i64, scratch_operands = 1 : i64, tpu.core_type = #tpu.core_type<tc>, window_params = [{transform_indices = @transform_0, window_bounds = array<i64: 1, 8, 32>}, {transform_indices = @transform_1, window_bounds = array<i64: 1, 16, 16>}, {pipeline_mode = #tpu.pipeline_mode<synchronous>, transform_indices = @transform_2, window_bounds = array<i64: 32, 64>}, {pipeline_mode = #tpu.pipeline_mode<synchronous>, transform_indices = @transform_3, window_bounds = array<i64: 16, 64>}, {transform_indices = @transform_4, window_bounds = array<i64: 1, 8, 16>}]} {
    %c0_i32 = arith.constant 0 : i32
    %0 = arith.cmpi eq, %arg1, %c0_i32 : i32
    %1 = arith.extui %0 : i1 to i32
    %c0_i32_0 = arith.constant 0 : i32
    %2 = arith.cmpi ne, %1, %c0_i32_0 : i32
    scf.if %2 {
      %c0_14 = arith.constant 0 : index
      %c0_15 = arith.constant 0 : index
      %c0_16 = arith.constant 0 : index
      %22 = vector.load %arg3[%c0_14, %c0_15, %c0_16] : memref<1x16x16xf32, #tpu.memory_space<vmem>>, vector<1x16x16xf32>
      %23 = vector.shape_cast %22 : vector<1x16x16xf32> to vector<16x16xf32>
      %24 = arith.truncf %23 : vector<16x16xf32> to vector<16x16xbf16>
      %c0_17 = arith.constant 0 : index
      %c0_18 = arith.constant 0 : index
      %25 = vector.load %arg5[%c0_17, %c0_18] : memref<16x64xbf16, #tpu.memory_space<vmem>>, vector<16x64xbf16>
      %cst_19 = arith.constant dense<0.000000e+00> : vector<16x64xf32>
      %26 = tpu.matmul %24, %25, %cst_19 {dimension_numbers = #tpu.dot_dimension_numbers<[1], [0], [0], [1], [0, 0, 1, 1], [], []>} : vector<16x16xbf16>, vector<16x64xbf16>, vector<16x64xf32> -> vector<16x64xf32>
      %27 = vector.shape_cast %26 : vector<16x64xf32> to vector<1x16x64xf32>
      %28 = arith.truncf %27 : vector<1x16x64xf32> to vector<1x16x64xbf16>
      %c0_20 = arith.constant 0 : index
      %c0_21 = arith.constant 0 : index
      %c0_22 = arith.constant 0 : index
      %29 = vector.load %arg7[%c0_20, %c0_21, %c0_22] : memref<1x16x64xbf16, #tpu.memory_space<vmem>>, vector<1x16x64xbf16>
      tpu.vector_store %arg7[%c0_20, %c0_21, %c0_22], %28 {strides = array<i32>} : memref<1x16x64xbf16, #tpu.memory_space<vmem>>, vector<1x16x64xbf16>,
    } else {
    }
    %c0 = arith.constant 0 : index
    %c0_1 = arith.constant 0 : index
    %c0_2 = arith.constant 0 : index
    %3 = vector.load %arg2[%c0, %c0_1, %c0_2] : memref<1x8x32xf32, #tpu.memory_space<vmem>>, vector<1x8x32xf32>
    %4 = vector.shape_cast %3 : vector<1x8x32xf32> to vector<8x32xf32>
    %5 = arith.truncf %4 : vector<8x32xf32> to vector<8x32xbf16>
    %c0_3 = arith.constant 0 : index
    %c0_4 = arith.constant 0 : index
    %6 = vector.load %arg4[%c0_3, %c0_4] : memref<32x64xbf16, #tpu.memory_space<vmem>>, vector<32x64xbf16>
    %cst = arith.constant dense<0.000000e+00> : vector<8x64xf32>
    %7 = tpu.matmul %5, %6, %cst {dimension_numbers = #tpu.dot_dimension_numbers<[1], [0], [0], [1], [0, 0, 1, 1], [], []>} : vector<8x32xbf16>, vector<32x64xbf16>, vector<8x64xf32> -> vector<8x64xf32>
    %8 = vector.shape_cast %7 : vector<8x64xf32> to vector<1x8x64xf32>
    %9 = arith.truncf %8 : vector<1x8x64xf32> to vector<1x8x64xbf16>
    %c0_5 = arith.constant 0 : index
    %c0_6 = arith.constant 0 : index
    %c0_7 = arith.constant 0 : index
    %10 = vector.load %arg7[%c0_5, %c0_6, %c0_7] : memref<1x16x64xbf16, #tpu.memory_space<vmem>>, vector<1x16x64xbf16>
    %cst_8 = arith.constant dense<0.000000e+00> : vector<1x8x16xf32>
    %11 = tpu.matmul %9, %10, %cst_8 {dimension_numbers = #tpu.dot_dimension_numbers<[2], [2], [1], [1], [0, 0, 0, 1, 1, 1], [0], [0]>} : vector<1x8x64xbf16>, vector<1x16x64xbf16>, vector<1x8x16xf32> -> vector<1x8x16xf32>
    %cst_9 = arith.constant dense<0xFF800000> : vector<1x8xf32>
    %12 = vector.multi_reduction <maximumf>, %11, %cst_9 [2] : vector<1x8x16xf32> to vector<1x8xf32>
    %13 = vector.shape_cast %12 : vector<1x8xf32> to vector<1x8x1xf32>
    %14 = vector.broadcast %13 : vector<1x8x1xf32> to vector<1x8x16xf32>
    %15 = arith.subf %11, %14 : vector<1x8x16xf32>
    %16 = math.exp %15 : vector<1x8x16xf32>
    %cst_10 = arith.constant dense<0.000000e+00> : vector<1x8xf32>
    %17 = vector.multi_reduction <add>, %16, %cst_10 [2] : vector<1x8x16xf32> to vector<1x8xf32>
    %18 = vector.shape_cast %17 : vector<1x8xf32> to vector<1x8x1xf32>
    %19 = vector.broadcast %18 : vector<1x8x1xf32> to vector<1x8x16xf32>
    %20 = arith.divf %16, %19 : vector<1x8x16xf32>
    %c0_11 = arith.constant 0 : index
    %c0_12 = arith.constant 0 : index
    %c0_13 = arith.constant 0 : index
    %21 = vector.load %arg6[%c0_11, %c0_12, %c0_13] : memref<1x8x16xf32, #tpu.memory_space<vmem>>, vector<1x8x16xf32>
    tpu.vector_store %arg6[%c0_11, %c0_12, %c0_13], %20 {strides = array<i32>} : memref<1x8x16xf32, #tpu.memory_space<vmem>>, vector<1x8x16xf32>,
    return
  }
  func.func @transform_0(%arg0: i32, %arg1: i32) -> (i32, i32, i32) {
    %c0_i32 = arith.constant 0 : i32
    %c0_i32_0 = arith.constant 0 : i32
    return %arg0, %arg1, %c0_i32 : i32, i32, i32
  }
  func.func @transform_1(%arg0: i32, %arg1: i32) -> (i32, i32, i32) {
    %c0_i32 = arith.constant 0 : i32
    %c0_i32_0 = arith.constant 0 : i32
    %c0_i32_1 = arith.constant 0 : i32
    return %arg0, %c0_i32, %c0_i32_0 : i32, i32, i32
  }
  func.func @transform_2(%arg0: i32, %arg1: i32) -> (i32, i32) {
    %c0_i32 = arith.constant 0 : i32
    %c0_i32_0 = arith.constant 0 : i32
    %c0_i32_1 = arith.constant 0 : i32
    return %c0_i32, %c0_i32_0 : i32, i32
  }
  func.func @transform_3(%arg0: i32, %arg1: i32) -> (i32, i32) {
    %c0_i32 = arith.constant 0 : i32
    %c0_i32_0 = arith.constant 0 : i32
    %c0_i32_1 = arith.constant 0 : i32
    return %c0_i32, %c0_i32_0 : i32, i32
  }
  func.func @transform_4(%arg0: i32, %arg1: i32) -> (i32, i32, i32) {
    %c0_i32 = arith.constant 0 : i32
    %c0_i32_0 = arith.constant 0 : i32
    return %arg0, %arg1, %c0_i32 : i32, i32, i32
  }
}

</mosaic_0001>

<llo_original>
// kernel: tpu_custom_call.1
$region0: #{tpu_custom_call.1}
  #allocation0 [shape = 'u32[]', space=smem, size = 0x4, offset = 0x4, fixed_abs, tag = 'smem constant byte address 0x4 - core index']
  #allocation1 [shape = 'u32[144,128]{1,0:T(1,128)}', space=vmem, size = 0x12000, scoped, tag = 'internal scratch']
  #allocation2 [shape = 'bf16[1,16,64]{2,1,0:T(8,128)(2,1)}', space=vmem, size = 0x1000, scoped, tag = 'scratch operand']
  %s0 = inlined_call_operand.hbm [shape: f32[2,8,32], index: 0, kind: input, shape index: {}]
  %s1 = inlined_call_operand.hbm [shape: f32[2,16,16], index: 1, kind: input, shape index: {}]
  %s2 = inlined_call_operand.hbm [shape: bf16[32,64], index: 2, kind: input, shape index: {}]
  %s3 = inlined_call_operand.hbm [shape: bf16[16,64], index: 3, kind: input, shape index: {}]
  %s4 = inlined_call_operand.hbm [shape: f32[2,8,16], index: 4, kind: output, shape index: {}]
  %s5 = sld [smem:[#allocation0]]
  $region69: #{tpu_custom_call.1} parent=0
    _
  %s7 = ssub.s32 1, %s5
  %s8 = scalar_select 0, %s7, %s5
  $region1: #{tpu_custom_call.1} parent=0
    #allocation3 [shape = 'u8[8192]{0}', space=vmem, size = 0x2000, scoped, tag = 'input window, operand 0']
    #allocation4 [shape = 's32[2]{0}', space=sflag, size = 0x8, scoped, tag = 'scoped memory for tpu_custom_call.1']
    #allocation5 [shape = 's32[2]{0}', space=sflag, size = 0x8, scoped, tag = 'scoped memory for tpu_custom_call.1']
    #allocation6 [shape = 'u8[16384]{0}', space=vmem, size = 0x4000, scoped, tag = 'input window, operand 1']
    #allocation7 [shape = 's32[2]{0}', space=sflag, size = 0x8, scoped, tag = 'scoped memory for tpu_custom_call.1']
    #allocation8 [shape = 'u8[8192]{0}', space=vmem, size = 0x2000, scoped, tag = 'input window, operand 2, single buffered']
    #allocation9 [shape = 'u8[4096]{0}', space=vmem, size = 0x1000, scoped, tag = 'input window, operand 3, single buffered']
    #allocation10 [shape = 's32[1]{0}', space=sflag, size = 0x4, scoped, tag = 'scoped memory for tpu_custom_call.1']
    #allocation11 [shape = 'u8[8192]{0}', space=vmem, size = 0x2000, scoped, tag = 'output window, operand 0']
    %9 = vsyncpa [#allocation4], 0
    %s10 = scalar_lea.sflag [#allocation4], 1
    %11 = vsyncpa %s10, 0
    %12 = vsyncpa [#allocation7], 0
    %s13 = scalar_lea.sflag [#allocation7], 1
    %14 = vsyncpa %s13, 0
    %15 = vsyncpa [#allocation10], 0
    %16 = vsyncpa [#allocation5], 0
    %s17 = scalar_lea.sflag [#allocation5], 1
    %18 = vsyncpa %s17, 0
    loop: start=0, step=1, limit=4
    $region2: #{tpu_custom_call.1} parent=1 // loop_pre_header
      _
    $region3: #{tpu_custom_call.1} parent=1 // loop_header
      %s20 = sphi 0, %s24
      %p21 = scmp.ge.s32.totalorder %s20, 4
      %s27 = sphi 0, %s39
      %s28 = sphi 0, %s35
      %s29 = sphi 0, %s27
      %s30 = sphi 0, %s28
      %s31 = sphi 0, %s29
      %s32 = sphi 0, %s30
      %s44 = sphi 0, %s46
      %s47 = sphi 0, %s44
      %s48 = sphi 0, %s47
      %s64 = sphi 0, %s48
      %s70 = sphi 0, %s72
      %s73 = sphi 0, %s70
      %s74 = sphi 0, %s73
      %s90 = sphi 0, %s74
      %s94 = sphi 0, %s94
      %s96 = sphi 0, %s94
      %s97 = sphi 0, %s96
      %s111 = sphi 0, %s97
      %s115 = sphi 0, %s115
      %s117 = sphi 0, %s115
      %s118 = sphi 0, %s117
      %s132 = sphi 0, %s118
      %s140 = sphi 0, %s142
      %s143 = sphi 0, %s140
      %s144 = sphi 0, %s143
      %s160 = sphi 0, %s144
    $region4: #{tpu_custom_call.1} parent=1 // loop_header_branch
      %23 = sbr.rel (%p21) target = $region8
    $region5: #{tpu_custom_call.1} parent=1 // loop_body
      %s25 = ssub.s32 %s20, 1
      %s26 = ssub.s32 %s20, 2
      %s33 = sadd.s32 1, %s28
      %p34 = scmp.ge.s32.totalorder %s33, 1
      %s35 = scalar_select %p34, 0, %s33
      %s36 = sadd.s32 1, %s27
      %s37 = scalar_select %p34, %s36, %s27
      %p38 = scmp.ge.s32.totalorder %s37, 2
      %s39 = scalar_select %p38, 0, %s37
      %s40 = ssub.s32 %s27, %s39
      %s41 = ssub.s32 %s28, %s35
      %s42 = sor.u32 %s40, %s41
      %p43 = scmp.eq.s32.totalorder %s42, 0
      %s45 = sadd.s32 %s44, 1
      %s46 = scalar_select %p43, %s44, %s45
      %p49 = pneg %p43
      %p50 = scmp.eq.s32.totalorder %s20, 1
      %p51 = por %p49, %p50
      %p52 = scmp.ne.s32.totalorder %s44, %s47
      %p53 = scmp.eq.s32.totalorder %s20, 0
      %p54 = por %p52, %p53
      %p55 = scmp.ne.s32.totalorder %s44, %s47
      %p56 = scmp.eq.s32.totalorder %s25, 1
      %p57 = por %p55, %p56
      %p58 = scmp.ne.s32.totalorder %s47, %s48
      %p59 = scmp.eq.s32.totalorder %s25, 0
      %p60 = por %p58, %p59
      %p61 = scmp.ne.s32.totalorder %s47, %s48
      %p62 = scmp.eq.s32.totalorder %s26, 1
      %p63 = por %p61, %p62
      %p65 = scmp.ne.s32.totalorder %s48, %s64
      %p66 = scmp.eq.s32.totalorder %s26, 0
      %p67 = por %p65, %p66
      %s68 = ssub.s32 %s27, %s39
      %p69 = scmp.eq.s32.totalorder %s68, 0
      %s71 = sadd.s32 %s70, 1
      %s72 = scalar_select %p69, %s70, %s71
      %p75 = pneg %p69
      %p76 = scmp.eq.s32.totalorder %s20, 1
      %p77 = por %p75, %p76
      %p78 = scmp.ne.s32.totalorder %s70, %s73
      %p79 = scmp.eq.s32.totalorder %s20, 0
      %p80 = por %p78, %p79
      %p81 = scmp.ne.s32.totalorder %s70, %s73
      %p82 = scmp.eq.s32.totalorder %s25, 1
      %p83 = por %p81, %p82
      %p84 = scmp.ne.s32.totalorder %s73, %s74
      %p85 = scmp.eq.s32.totalorder %s25, 0
      %p86 = por %p84, %p85
      %p87 = scmp.ne.s32.totalorder %s73, %s74
      %p88 = scmp.eq.s32.totalorder %s26, 1
      %p89 = por %p87, %p88
      %p91 = scmp.ne.s32.totalorder %s74, %s90
      %p92 = scmp.eq.s32.totalorder %s26, 0
      %p93 = por %p91, %p92
      %s95 = sadd.s32 %s94, 1
      %p98 = scmp.eq.s32.totalorder %s20, 1
      %p99 = scmp.ne.s32.totalorder %s94, %s96
      %p100 = scmp.eq.s32.totalorder %s20, 0
      %p101 = por %p99, %p100
      %p102 = scmp.ne.s32.totalorder %s94, %s96
      %p103 = scmp.eq.s32.totalorder %s25, 1
      %p104 = por %p102, %p103
      %p105 = scmp.ne.s32.totalorder %s96, %s97
      %p106 = scmp.eq.s32.totalorder %s25, 0
      %p107 = por %p105, %p106
      %p108 = scmp.ne.s32.totalorder %s96, %s97
      %p109 = scmp.eq.s32.totalorder %s26, 1
      %p110 = por %p108, %p109
      %p112 = scmp.ne.s32.totalorder %s97, %s111
      %p113 = scmp.eq.s32.totalorder %s26, 0
      %p114 = por %p112, %p113
      %s116 = sadd.s32 %s115, 1
      %p119 = scmp.eq.s32.totalorder %s20, 1
      %p120 = scmp.ne.s32.totalorder %s115, %s117
      %p121 = scmp.eq.s32.totalorder %s20, 0
      %p122 = por %p120, %p121
      %p123 = scmp.ne.s32.totalorder %s115, %s117
      %p124 = scmp.eq.s32.totalorder %s25, 1
      %p125 = por %p123, %p124
      %p126 = scmp.ne.s32.totalorder %s117, %s118
      %p127 = scmp.eq.s32.totalorder %s25, 0
      %p128 = por %p126, %p127
      %p129 = scmp.ne.s32.totalorder %s117, %s118
      %p130 = scmp.eq.s32.totalorder %s26, 1
      %p131 = por %p129, %p130
      %p133 = scmp.ne.s32.totalorder %s118, %s132
      %p134 = scmp.eq.s32.totalorder %s26, 0
      %p135 = por %p133, %p134
      %s136 = ssub.s32 %s27, %s39
      %s137 = ssub.s32 %s28, %s35
      %s138 = sor.u32 %s136, %s137
      %p139 = scmp.eq.s32.totalorder %s138, 0
      %s141 = sadd.s32 %s140, 1
      %s142 = scalar_select %p139, %s140, %s141
      %p145 = pneg %p139
      %p146 = scmp.eq.s32.totalorder %s20, 1
      %p147 = por %p145, %p146
      %p148 = scmp.ne.s32.totalorder %s140, %s143
      %p149 = scmp.eq.s32.totalorder %s20, 0
      %p150 = por %p148, %p149
      %p151 = scmp.ne.s32.totalorder %s140, %s143
      %p152 = scmp.eq.s32.totalorder %s25, 1
      %p153 = por %p151, %p152
      %p154 = scmp.ne.s32.totalorder %s143, %s144
      %p155 = scmp.eq.s32.totalorder %s25, 0
      %p156 = por %p154, %p155
      %p157 = scmp.ne.s32.totalorder %s143, %s144
      %p158 = scmp.eq.s32.totalorder %s26, 1
      %p159 = por %p157, %p158
      %p161 = scmp.ne.s32.totalorder %s144, %s160
      %p162 = scmp.eq.s32.totalorder %s26, 0
      %p163 = por %p161, %p162
      %p164 = scmp.le.s32.totalorder 1, %s20
      %p165 = scmp.lt.s32.totalorder %s20, 3
      %p166 = pnand %p164, %p165
      %p167 = pneg %p166
      // Predicated region
      $region9: #{tpu_custom_call.1} parent=5 // pred_check
        _
      $region10: #{tpu_custom_call.1} parent=5 // pred_check_branch
        %169 = sbr.rel (%p166) target = $region12
      $region11: #{tpu_custom_call.1} parent=5 // pred_region
        %s170 = ssub.s32 %s20, 1
        // Predicated region
        $region13: #{tpu_custom_call.1} parent=11 // pred_check
          %p171 = pneg %p107
        $region14: #{tpu_custom_call.1} parent=11 // pred_check_branch
          %173 = sbr.rel (%p171) target = $region16
        $region15: #{tpu_custom_call.1} parent=11 // pred_region
          %s175 = ssub.s32 256, 256
          %176 = vsyncadd [#allocation7], %s175
          %s177 = sshll.u32 [#allocation8], 4
          %s178 = int_to_ptr.vmem [resolvable:$true] %s177
          %183 = dma.hbm_to_vmem [thread:$0]  %s2, 256, %s178, [#allocation7], 64, 64, 4
        $region16: #{tpu_custom_call.1} parent=11 // pred_fallthru
          _
        // Predicated region
        $region17: #{tpu_custom_call.1} parent=11 // pred_check
          %p184 = pneg %p128
        $region18: #{tpu_custom_call.1} parent=11 // pred_check_branch
          %186 = sbr.rel (%p184) target = $region20
        $region19: #{tpu_custom_call.1} parent=11 // pred_region
          %s188 = ssub.s32 128, 128
          %189 = vsyncadd [#allocation10], %s188
          %s190 = sshll.u32 [#allocation9], 4
          %s191 = int_to_ptr.vmem [resolvable:$true] %s190
          %196 = dma.hbm_to_vmem [thread:$0]  %s3, 128, %s191, [#allocation10], 64, 64, 4
        $region20: #{tpu_custom_call.1} parent=11 // pred_fallthru
          _
      $region12: #{tpu_custom_call.1} parent=5 // pred_fallthru
        _
      %p197 = scmp.lt.s32.totalorder %s20, 2
      // Predicated region
      $region21: #{tpu_custom_call.1} parent=5 // pred_check
        %p198 = pneg %p197
      $region22: #{tpu_custom_call.1} parent=5 // pred_check_branch
        %200 = sbr.rel (%p198) target = $region24
      $region23: #{tpu_custom_call.1} parent=5 // pred_region
        // Predicated region
        $region25: #{tpu_custom_call.1} parent=23 // pred_check
          %p201 = pneg %p54
        $region26: #{tpu_custom_call.1} parent=23 // pred_check_branch
          %203 = sbr.rel (%p201) target = $region28
        $region27: #{tpu_custom_call.1} parent=23 // pred_region
          %s204 = sand.u32 %s44, 1
          %s205 = scalar_lea.sflag [#allocation4], %s204
          %s206 = sand.u32 %s44, 1
          %s207 = smul.addr %s206, 8
          %s208 = scalar_lea.vmem [#allocation3], %s207
          %s210 = ssub.s32 128, 128
          %211 = vsyncadd %s205, %s210
          %s212 = sadd.s32 %s28, %s27
          %s213 = smul.addr %s212, 128
          %s214 = scalar_lea.hbm %s0, %s213
          %s216 = sshll.u32 %s208, 4
          %s217 = int_to_ptr.vmem [resolvable:$true] %s216
          %219 = dma.hbm_to_vmem [thread:$0]  %s214, 128, %s217, %s205
        $region28: #{tpu_custom_call.1} parent=23 // pred_fallthru
          _
        // Predicated region
        $region29: #{tpu_custom_call.1} parent=23 // pred_check
          %p220 = pneg %p80
        $region30: #{tpu_custom_call.1} parent=23 // pred_check_branch
          %222 = sbr.rel (%p220) target = $region32
        $region31: #{tpu_custom_call.1} parent=23 // pred_region
          %s223 = sand.u32 %s20, 1
          %s224 = scalar_lea.sflag [#allocation7], %s223
          %s225 = sand.u32 %s70, 1
          %s226 = smul.addr %s225, 16
          %s227 = scalar_lea.vmem [#allocation6], %s226
          %s229 = ssub.s32 256, 256
          %230 = vsyncadd %s224, %s229
          %s231 = smul.addr %s27, 2
          %s232 = smul.addr %s231, 128
          %s233 = scalar_lea.hbm %s1, %s232
          %s234 = sshll.u32 %s227, 4
          %s235 = int_to_ptr.vmem [resolvable:$true] %s234
          %240 = dma.hbm_to_vmem [thread:$0]  %s233, 256, %s235, %s224, 128, 128, 8
        $region32: #{tpu_custom_call.1} parent=23 // pred_fallthru
          _
      $region24: #{tpu_custom_call.1} parent=5 // pred_fallthru
        _
      %p241 = scmp.le.s32.totalorder 1, %s20
      %p242 = scmp.lt.s32.totalorder %s20, 3
      %p243 = pnand %p241, %p242
      %p244 = pneg %p243
      // Predicated region
      $region33: #{tpu_custom_call.1} parent=5 // pred_check
        _
      $region34: #{tpu_custom_call.1} parent=5 // pred_check_branch
        %246 = sbr.rel (%p243) target = $region36
      $region35: #{tpu_custom_call.1} parent=5 // pred_region
        %s247 = ssub.s32 %s20, 1
        %s248 = sand.u32 %s47, 1
        %s249 = scalar_lea.sflag [#allocation4], %s248
        %s250 = sand.u32 %s47, 1
        %s251 = smul.addr %s250, 8
        %s252 = scalar_lea.vmem [#allocation3], %s251
        // Predicated region
        $region37: #{tpu_custom_call.1} parent=35 // pred_check
          %p253 = pneg %p60
        $region38: #{tpu_custom_call.1} parent=35 // pred_check_branch
          %255 = sbr.rel (%p253) target = $region40
        $region39: #{tpu_custom_call.1} parent=35 // pred_region
          %256 = dma.done %s249, 128
        $region40: #{tpu_custom_call.1} parent=35 // pred_fallthru
          _
        %s257 = sand.u32 %s25, 1
        %s258 = scalar_lea.sflag [#allocation7], %s257
        %s259 = sand.u32 %s73, 1
        %s260 = smul.addr %s259, 16
        %s261 = scalar_lea.vmem [#allocation6], %s260
        // Predicated region
        $region41: #{tpu_custom_call.1} parent=35 // pred_check
          %p262 = pneg %p86
        $region42: #{tpu_custom_call.1} parent=35 // pred_check_branch
          %264 = sbr.rel (%p262) target = $region44
        $region43: #{tpu_custom_call.1} parent=35 // pred_region
          %265 = dma.done %s258, 256
        $region44: #{tpu_custom_call.1} parent=35 // pred_fallthru
          _
        // Predicated region
        $region45: #{tpu_custom_call.1} parent=35 // pred_check
          %p266 = pneg %p107
        $region46: #{tpu_custom_call.1} parent=35 // pred_check_branch
          %268 = sbr.rel (%p266) target = $region48
        $region47: #{tpu_custom_call.1} parent=35 // pred_region
          %269 = dma.done [#allocation7], 256
        $region48: #{tpu_custom_call.1} parent=35 // pred_fallthru
          _
        // Predicated region
        $region49: #{tpu_custom_call.1} parent=35 // pred_check
          %p270 = pneg %p128
        $region50: #{tpu_custom_call.1} parent=35 // pred_check_branch
          %272 = sbr.rel (%p270) target = $region52
        $region51: #{tpu_custom_call.1} parent=35 // pred_region
          %273 = dma.done [#allocation10], 128
        $region52: #{tpu_custom_call.1} parent=35 // pred_fallthru
          _
        %s274 = sand.u32 %s47, 1
        %s275 = scalar_lea.sflag [#allocation4], %s274
        %s276 = sand.u32 %s47, 1
        %s277 = smul.addr %s276, 8
        %s278 = scalar_lea.vmem [#allocation3], %s277
        %p279 = pneg %p60
        %p280 = pneg %p57
        %s281 = sand.u32 %s25, 1
        %s282 = scalar_lea.sflag [#allocation7], %s281
        %s283 = sand.u32 %s73, 1
        %s284 = smul.addr %s283, 16
        %s285 = scalar_lea.vmem [#allocation6], %s284
        %p286 = pneg %p86
        %p287 = pneg %p83
        %p288 = pneg %p107
        %p289 = pneg %p104
        %p290 = pneg %p128
        %p291 = pneg %p125
        %p292 = pneg %p156
        %p293 = pneg %p153
        %s294 = sand.u32 %s143, 1
        %s295 = scalar_lea.sflag [#allocation5], %s294
        %s296 = sand.u32 %s143, 1
        %s297 = smul.addr %s296, 8
        %s298 = scalar_lea.vmem [#allocation11], %s297
        %p300 = scmp.eq.s32.totalorder %s30, 0
        // Predicated region
        $region53: #{tpu_custom_call.1} parent=35 // pred_check
          %p301 = pneg %p300
        $region54: #{tpu_custom_call.1} parent=35 // pred_check_branch
          %303 = sbr.rel (%p301) target = $region56
        $region55: #{tpu_custom_call.1} parent=35 // pred_region
          %v304 = vld [vmem:[%s261] sm:$0xff]
          %v305 = vld [vmem:[%s261 + $0x8] sm:$0xff]
          %v306 = vpack.c.bf16 %v305, %v304
          %v307 = vld [vmem:[#allocation9] sm:$0xf]
          %v308 = vld [vmem:[#allocation9 + $0x4] sm:$0xf]
          %v311 = vunpack.c.l.b16 %v307
          %v312 = vunpack.c.l.b16 %v308
          %v313 = vpack.c.b16 %v312, %v311
          %vm315 = vcmask 130048
          %v317 = vsel %vm315, %v306, 0
          %319 = vmatprep.subr.bf16.mxu0 0
          %320 = vmatpush1.bf16.msra.mxu0 0
          %321 = vmatprep.subr.bf16.mxu0 0
          %322 = vmatpush1.bf16.msra.mxu0 0
          %323 = vmatprep.subr.bf16.mxu0 0
          %324 = vmatpush1.bf16.msra.mxu0 0
          %325 = vmatprep.subr.bf16.mxu0 0
          %326 = vmatpush1.bf16.msra.mxu0 0
          %327 = vmatprep.subr.bf16.mxu0 0
          %328 = vmatpush1.bf16.msra.mxu0 0
          %329 = vmatprep.subr.bf16.mxu0 0
          %330 = vmatpush1.bf16.msra.mxu0 0
          %331 = vmatprep.subr.bf16.mxu0 0
          %332 = vmatpush1.bf16.msra.mxu0 0
          %333 = vmatprep.subr.bf16.mxu0 0
          %334 = vmatpush1.bf16.msra.mxu0 %v313
          %335 = vmatprep.subr.bf16.mxu0 0
          %336 = vmatpush2.bf16.msra.mxu0 0
          %337 = vmatprep.subr.bf16.mxu0 0
          %338 = vmatpush2.bf16.msra.mxu0 0
          %339 = vmatprep.subr.bf16.mxu0 0
          %340 = vmatpush2.bf16.msra.mxu0 0
          %341 = vmatprep.subr.bf16.mxu0 0
          %342 = vmatpush2.bf16.msra.mxu0 0
          %343 = vmatprep.subr.bf16.mxu0 0
          %344 = vmatpush2.bf16.msra.mxu0 0
          %345 = vmatprep.subr.bf16.mxu0 0
          %346 = vmatpush2.bf16.msra.mxu0 0
          %347 = vmatprep.subr.bf16.mxu0 0
          %348 = vmatpush2.bf16.msra.mxu0 0
          %349 = vmatprep.subr.bf16.mxu0 0
          %350 = vmatpush2.bf16.msra.mxu0 0
          %351 = vmatprep.mubr.bf16.mxu0 0
          %352 = vmatmul.mubr.bf16.gmra.mxu0 %v317
          %v353 = vpop.f32.mrf.mxu0
          %v354 = vadd.f32 0.0, %v353
          %v355 = vpop.f32.mrf.mxu0
          %v356 = vpop.f32.mrf.mxu0
          %v357 = vadd.f32 0.0, %v356
          %v358 = vpop.f32.mrf.mxu0
          %359 = vdwg.mxu0
          %v360 = vpack.c.bf16 %v357, %v354
          %v362 = vunpack.c.l.b16 %v360
          %v363 = vunpack.c.h.b16 %v360
          %v364 = vpack.c.b16 %v362, %v362
          %v365 = vpack.c.b16 %v363, %v363
          %vm368 = vcmask 519168
          %369 = vst.msk [vmem:[#allocation2] sm:$0xf] %vm368, %v364
          %370 = vst.msk [vmem:[#allocation2 + $0x4] sm:$0xf] %vm368, %v365
        $region56: #{tpu_custom_call.1} parent=35 // pred_fallthru
          _
        %v371 = vld [vmem:[%s252] sm:$0xff]
        %v372 = vpack.c.bf16 %v371, %v371
        %v373 = vld [vmem:[#allocation8] sm:$0xf]
        %v374 = vld [vmem:[#allocation8 + $0x4] sm:$0xf]
        %v375 = vld [vmem:[#allocation8 + $0x8] sm:$0xf]
        %v376 = vld [vmem:[#allocation8 + $0xc] sm:$0xf]
        %v381 = vunpack.c.l.b16 %v373
        %v382 = vunpack.c.l.b16 %v374
        %v383 = vunpack.c.l.b16 %v375
        %v384 = vunpack.c.l.b16 %v376
        %v385 = vpack.c.b16 %v382, %v381
        %v386 = vpack.c.b16 %v384, %v383
        %vm389 = vcmask 261120
        %v391 = vsel %vm389, %v372, 0
        %393 = vmatprep.subr.bf16.mxu0 0
        %394 = vmatpush1.bf16.msra.mxu0 0
        %395 = vmatprep.subr.bf16.mxu0 0
        %396 = vmatpush1.bf16.msra.mxu0 0
        %397 = vmatprep.subr.bf16.mxu0 0
        %398 = vmatpush1.bf16.msra.mxu0 0
        %399 = vmatprep.subr.bf16.mxu0 0
        %400 = vmatpush1.bf16.msra.mxu0 0
        %401 = vmatprep.subr.bf16.mxu0 0
        %402 = vmatpush1.bf16.msra.mxu0 0
        %403 = vmatprep.subr.bf16.mxu0 0
        %404 = vmatpush1.bf16.msra.mxu0 0
        %405 = vmatprep.subr.bf16.mxu0 0
        %406 = vmatpush1.bf16.msra.mxu0 %v386
        %407 = vmatprep.subr.bf16.mxu0 0
        %408 = vmatpush1.bf16.msra.mxu0 %v385
        %409 = vmatprep.subr.bf16.mxu0 0
        %410 = vmatpush2.bf16.msra.mxu0 0
        %411 = vmatprep.subr.bf16.mxu0 0
        %412 = vmatpush2.bf16.msra.mxu0 0
        %413 = vmatprep.subr.bf16.mxu0 0
        %414 = vmatpush2.bf16.msra.mxu0 0
        %415 = vmatprep.subr.bf16.mxu0 0
        %416 = vmatpush2.bf16.msra.mxu0 0
        %417 = vmatprep.subr.bf16.mxu0 0
        %418 = vmatpush2.bf16.msra.mxu0 0
        %419 = vmatprep.subr.bf16.mxu0 0
        %420 = vmatpush2.bf16.msra.mxu0 0
        %421 = vmatprep.subr.bf16.mxu0 0
        %422 = vmatpush2.bf16.msra.mxu0 0
        %423 = vmatprep.subr.bf16.mxu0 0
        %424 = vmatpush2.bf16.msra.mxu0 0
        %425 = vmatprep.mubr.bf16.mxu0 0
        %426 = vmatmul.mubr.bf16.gmra.mxu0 %v391
        %v427 = vpop.f32.mrf.mxu0
        %v428 = vadd.f32 0.0, %v427
        %v429 = vpop.f32.mrf.mxu0
        %v430 = vpop.f32.mrf.mxu0
        %v431 = vpop.f32.mrf.mxu0
        %432 = vdwg.mxu0
        %v433 = vpack.c.bf16 %v428, %v428
        %v434 = vld [vmem:[#allocation2] sm:$0xf]
        %v435 = vld [vmem:[#allocation2 + $0x4] sm:$0xf]
        %v438 = vunpack.c.l.b16 %v434
        %v439 = vunpack.c.l.b16 %v435
        %v440 = vpack.c.b16 %v439, %v438
        %vm441 = vcmask 523264
        %v443 = vsel %vm441, %v433, 0
        %v446 = vsel %vm441, %v440, 0
        %448 = vmatprep.subr.bf16.mxu0 0
        %449 = vmatpush1.bf16.xpose.msra.mxu0 0
        %450 = vmatprep.subr.bf16.mxu0 0
        %451 = vmatpush1.bf16.xpose.msra.mxu0 0
        %452 = vmatprep.subr.bf16.mxu0 0
        %453 = vmatpush1.bf16.xpose.msra.mxu0 0
        %454 = vmatprep.subr.bf16.mxu0 0
        %455 = vmatpush1.bf16.xpose.msra.mxu0 0
        %456 = vmatprep.subr.bf16.mxu0 0
        %457 = vmatpush1.bf16.xpose.msra.mxu0 0
        %458 = vmatprep.subr.bf16.mxu0 0
        %459 = vmatpush1.bf16.xpose.msra.mxu0 0
        %460 = vmatprep.subr.bf16.mxu0 0
        %461 = vmatpush1.bf16.xpose.msra.mxu0 0
        %462 = vmatprep.subr.bf16.mxu0 0
        %463 = vmatpush1.bf16.xpose.msra.mxu0 %v446
        %464 = vmatprep.subr.bf16.mxu0 0
        %465 = vmatpush2.bf16.xpose.msra.mxu0 0
        %466 = vmatprep.subr.bf16.mxu0 0
        %467 = vmatpush2.bf16.xpose.msra.mxu0 0
        %468 = vmatprep.subr.bf16.mxu0 0
        %469 = vmatpush2.bf16.xpose.msra.mxu0 0
        %470 = vmatprep.subr.bf16.mxu0 0
        %471 = vmatpush2.bf16.xpose.msra.mxu0 0
        %472 = vmatprep.subr.bf16.mxu0 0
        %473 = vmatpush2.bf16.xpose.msra.mxu0 0
        %474 = vmatprep.subr.bf16.mxu0 0
        %475 = vmatpush2.bf16.xpose.msra.mxu0 0
        %476 = vmatprep.subr.bf16.mxu0 0
        %477 = vmatpush2.bf16.xpose.msra.mxu0 0
        %478 = vmatprep.subr.bf16.mxu0 0
        %479 = vmatpush2.bf16.xpose.msra.mxu0 0
        %480 = vmatprep.mubr.bf16.mxu0 0
        %481 = vmatmul.mubr.bf16.gmra.mxu0 %v443
        %v482 = vpop.f32.mrf.mxu0
        %v483 = vadd.f32 0.0, %v482
        %v484 = vpop.f32.mrf.mxu0
        %v485 = vpop.f32.mrf.mxu0
        %v486 = vpop.f32.mrf.mxu0
        %487 = vdwg.mxu0
        %vm488 = vcmask 130048
        %v489 = vsel %vm488, %v483, -inf
        %490 = vmax.xlane.f32.xlu0 %v489
        %v491 = vpop.xlane.xlu0 %490
        %v492 = vsub.f32 %v483, %v491
        %v493 = vmul.f32 %v492, 1.442695
        %v494 = vpow.pop %v493
        %v495 = vsel %vm488, %v494, 0.0
        %496 = vadd.xlane.f32.xlu0 %v495
        %v497 = vpop.xlane.xlu0 %496
        %v498 = vrcp.pop %v497
        %v499 = vmul.f32 %v494, %v498
        %500 = vst.msk [vmem:[%s298] sm:$0xff] %vm488, %v499
        %s501 = sand.u32 %s143, 1
        %s502 = scalar_lea.sflag [#allocation5], %s501
        %s503 = sand.u32 %s143, 1
        %s504 = smul.addr %s503, 8
        %s505 = scalar_lea.vmem [#allocation11], %s504
        // Predicated region
        $region57: #{tpu_custom_call.1} parent=35 // pred_check
          %p506 = pneg %p153
        $region58: #{tpu_custom_call.1} parent=35 // pred_check_branch
          %508 = sbr.rel (%p506) target = $region60
        $region59: #{tpu_custom_call.1} parent=35 // pred_region
          %s510 = ssub.s32 128, 128
          %511 = vsyncadd %s502, %s510
          %s512 = sadd.s32 %s30, %s29
          %s513 = smul.addr %s512, 128
          %s514 = scalar_lea.hbm %s4, %s513
          %s516 = sshll.u32 %s505, 4
          %s517 = int_to_ptr.vmem [resolvable:$true] %s516
          %519 = dma.vmem_to_hbm [thread:$0]  %s517, 128, %s514, %s502
        $region60: #{tpu_custom_call.1} parent=35 // pred_fallthru
          _
      $region36: #{tpu_custom_call.1} parent=5 // pred_fallthru
        _
      %p520 = scmp.le.s32.totalorder 2, %s20
      // Predicated region
      $region61: #{tpu_custom_call.1} parent=5 // pred_check
        %p521 = pneg %p520
      $region62: #{tpu_custom_call.1} parent=5 // pred_check_branch
        %523 = sbr.rel (%p521) target = $region64
      $region63: #{tpu_custom_call.1} parent=5 // pred_region
        %s524 = ssub.s32 %s20, 2
        // Predicated region
        $region65: #{tpu_custom_call.1} parent=63 // pred_check
          %p525 = pneg %p159
        $region66: #{tpu_custom_call.1} parent=63 // pred_check_branch
          %527 = sbr.rel (%p525) target = $region68
        $region67: #{tpu_custom_call.1} parent=63 // pred_region
          %s528 = sand.u32 %s144, 1
          %s529 = scalar_lea.sflag [#allocation5], %s528
          %s530 = sand.u32 %s144, 1
          %s531 = smul.addr %s530, 8
          %s532 = scalar_lea.vmem [#allocation11], %s531
          %533 = dma.done %s529, 128
        $region68: #{tpu_custom_call.1} parent=63 // pred_fallthru
          _
      $region64: #{tpu_custom_call.1} parent=5 // pred_fallthru
        _
    $region6: #{tpu_custom_call.1} parent=1 // loop_footer
      %s24 = sadd.s32 1, %s20
    $region7: #{tpu_custom_call.1} parent=1 // loop_footer_branch
      %19 = sbr.rel target = $region3
    $region8: #{tpu_custom_call.1} parent=1 // loop_exit
      _
    %534 = vsyncpa [#allocation4], 1
    %s535 = scalar_lea.sflag [#allocation4], 1
    %536 = vsyncpa %s535, 1
    %537 = vsyncpa [#allocation7], 1
    %s538 = scalar_lea.sflag [#allocation7], 1
    %539 = vsyncpa %s538, 1
    %540 = vsyncpa [#allocation10], 1
    %541 = vsyncpa [#allocation5], 1
    %s542 = scalar_lea.sflag [#allocation5], 1
    %543 = vsyncpa %s542, 1

</llo_original>
